<compile_context>
chip_gen: v6e
topology: v6e:2x2x1
jax: 0.10.0
libtpu: 0.0.40
codegen_flags: <defaults>
</compile_context>

<pallas_src>
import functools
import math

import jax
import jax.numpy as jnp
from jax.experimental import pallas as pl
from jax.experimental.pallas import tpu as pltpu


def _round_up(x, m):
    return (x + m - 1) // m * m


def _tensorcores_per_chip():
    """Best-effort TensorCores-per-chip (v7x = 2, v5e/v6e = 1). Perf-only hint."""
    try:
        info = pltpu.get_tpu_info()
        for name in ("num_cores", "core_count", "tensorcores_per_chip",
                     "num_tensorcores", "num_tensor_cores"):
            val = getattr(info, name, None)
            if isinstance(val, int) and val > 0:
                return val
    except Exception:
        pass
    try:
        dev = jax.devices()[0]
        if dev.platform == "tpu" and "7" in dev.device_kind:
            return 2
    except Exception:
        pass
    return 1


def cosine_t2v_kernel(tau_ref, w_ref, m_ref, o_ref):
    # tau_ref: (TG, R*(F+1))   R interleaved rows, each [features | 1.0 bias col]
    # w_ref  : (R*(F+1), R*H)  block-diagonal replication of [[w | w0], [b | b0]]
    # m_ref  : (1, R*H)        1.0 on cosine lanes, 0.0 on the linear (v2) lane
    # o_ref  : (TG, R*H)       lane-dense output slab (R*H is a multiple of 128)
    #
    # Bias is already inside the matmul (ones column), so the body is one MXU
    # dot + cos + select.  The mask is kept as f32 + one vcmp per vreg (instead
    # of a bool memref) for lowering safety; the compare is negligible next to
    # the ~20-op cos polynomial on the VPU.
    z = jnp.dot(tau_ref[...], w_ref[...], preferred_element_type=jnp.float32)
    o_ref[...] = jnp.where(m_ref[...] > 0.5, jnp.cos(z), z).astype(o_ref.dtype)


_OUT_TILE_BUDGET = 6 << 20    # ~6 MiB output per pipeline buffer (review: 4-8 MiB)
_MIN_TILE_BYTES = 512 << 10   # keep per-step output >= ~0.5 MiB so the ~0.35 us
                              # per-grid-step overhead stays a few % of the step


@functools.partial(jax.jit, static_argnames=("block_rows", "out_dtype"))
def cosine_activation_forward(tau, w, b, w0, b0, *, block_rows=65536, out_dtype=None):
    """CosineActivation: concat([cos(tau@w + b), tau@w0 + b0], axis=1) -> (N, H).

    tau: (N, F); w: (F, H-1); b: (H-1,); w0: (F, 1); b0: (1,).
    out_dtype: optional output dtype (e.g. jnp.bfloat16 on store-bound v5e);
               compute is always f32.
    """
    n, f = tau.shape
    hidden = w.shape[1] + 1
    out_dtype = jnp.dtype(out_dtype) if out_dtype is not None else jnp.dtype(tau.dtype)
    osize = out_dtype.itemsize

    # ---- interleave factor: R rows per lane-dense output slab row -------------
    # R*H is always a multiple of 128 -> unmasked full-lane stores for any H.
    r = math.lcm(hidden, 128) // hidden
    # Cap the replicated block-diagonal weight footprint while keeping R*H a
    # multiple of 128; pathological H falls back to r=1 (masked stores, but safe).
    while r > 1 and (r * (f + 1)) * (r * hidden) * 4 > (8 << 20):
        if r % 2 == 0 and ((r // 2) * hidden) % 128 == 0:
            r //= 2
        else:
            r = 1
            break

    # ---- wrapper-side packing (tau is tiny: N x F, vs the N x H output) -------
    tau32 = tau.astype(jnp.float32)
    ones = jnp.ones((n, 1), jnp.float32)
    tau_aug = jnp.concatenate([tau32, ones], axis=1)            # (N, F+1) bias col
    n_pad = _round_up(n, r)
    if n_pad != n:
        tau_aug = jnp.pad(tau_aug, ((0, n_pad - n), (0, 0)))    # cheap: tau is tiny
    g = n_pad // r
    tau_r = tau_aug.reshape(g, r * (f + 1))                     # free row-major regroup

    wcat = jnp.concatenate([w, w0], axis=1).astype(jnp.float32)            # (F, H)
    bcat = jnp.concatenate([b, b0], axis=0).astype(jnp.float32)[None, :]   # (1, H)
    w_aug = jnp.concatenate([wcat, bcat], axis=0)                          # (F+1, H)
    w_blk = jnp.kron(jnp.eye(r, dtype=jnp.float32), w_aug)       # (R*(F+1), R*H)
    mask = jnp.tile(
        jnp.concatenate([jnp.ones((hidden - 1,), jnp.float32),
                         jnp.zeros((1,), jnp.float32)]), r).reshape(1, r * hidden)

    # ---- tile / grid selection --------------------------------------------------
    num_tc = _tensorcores_per_chip()
    row_out_bytes = r * hidden * osize
    cap_rows = max(8, min(_OUT_TILE_BUDGET // row_out_bytes,
                          max(8, block_rows // max(1, r))))
    cap_rows = max(8, (cap_rows // 8) * 8)
    min_rows = max(8, _round_up(max(1, _MIN_TILE_BYTES // row_out_bytes), 8))

    steps_cap = pl.cdiv(g, cap_rows)           # lower bound from the VMEM budget
    steps_min = max(1, g // min_rows)          # upper bound: amortize step overhead
    steps = max(min(max(steps_cap, 4), steps_min), steps_cap)
    if num_tc > 1 and g >= 2 * 8:
        steps = _round_up(steps, num_tc)       # even split across v7x's two TCs
    if steps <= 1:
        tg = g                                 # single full-extent block (any g)
    else:
        tg = max(8, _round_up(pl.cdiv(g, steps), 8))
    steps = pl.cdiv(g, tg)                     # partial tail block: OOB writes dropped
    grid = (steps,)

    # ---- explicit VMEM budget: double-buffered tiles + resident weights --------
    # (v5e's scoped default is only 16 MiB; v7x physical is 64 MiB, so cap at 48.)
    tile_bytes = tg * (row_out_bytes + r * (f + 1) * 4)
    resident = (w_blk.size + mask.size) * 4
    vmem_limit = int(min(48 << 20, max(16 << 20, 2 * tile_bytes + resident + (4 << 20))))

    cost = pl.CostEstimate(
        flops=2 * n_pad * (f + 1) * hidden,
        transcendentals=n_pad * (hidden - 1),
        bytes_accessed=(tau_r.size + w_blk.size + mask.size) * 4
                       + n_pad * hidden * osize,
    )

    out_r = pl.pallas_call(
        cosine_t2v_kernel,
        out_shape=jax.ShapeDtypeStruct((g, r * hidden), out_dtype),
        grid_spec=pltpu.PrefetchScalarGridSpec(
            num_scalar_prefetch=0,
            grid=grid,
            in_specs=[
                pl.BlockSpec((tg, r * (f + 1)), lambda i: (i, 0)),          # tau rows
                pl.BlockSpec((r * (f + 1), r * hidden), lambda i: (0, 0)),  # weights+bias
                pl.BlockSpec((1, r * hidden), lambda i: (0, 0)),            # cos-lane mask
            ],
            out_specs=pl.BlockSpec((tg, r * hidden), lambda i: (i, 0)),
        ),
        compiler_params=pltpu.CompilerParams(
            dimension_semantics=("parallel",),
            vmem_limit_bytes=vmem_limit,
        ),
        cost_estimate=cost,
    )(tau_r, w_blk, mask)

    out = out_r.reshape(n_pad, hidden)         # free row-major regroup
    if n_pad != n:
        # Ragged tail only (N % R != 0): this slice copies the output once.
        # Hot-path callers should keep N a multiple of R (= lcm(H,128)//H).
        out = out[:n]
    return out


def reference_forward(tau, w, b, w0, b0):
    v1 = jnp.cos(tau @ w + b)
    v2 = tau @ w0 + b0
    return jnp.concatenate([v1, v2], axis=1)


if __name__ == "__main__":
    # (N, F, H): usual in_features=1 case; multi-feature; ragged N (pad+slice
    # path); and an H that does not divide 128 (lcm-based interleave).
    cases = [(200, 1, 32), (64, 2, 32), (57, 1, 32), (40, 1, 24)]
    for n, in_feat, hidden_dim in cases:
        key = jax.random.PRNGKey(0)
        k_tau, k_w, k_b, k_w0, k_b0 = jax.random.split(key, 5)
        tau = jax.random.normal(k_tau, (n, in_feat), dtype=jnp.float32)
        w = jax.random.normal(k_w, (in_feat, hidden_dim - 1), dtype=jnp.float32)
        b = jax.random.normal(k_b, (hidden_dim - 1,), dtype=jnp.float32)
        w0 = jax.random.normal(k_w0, (in_feat, 1), dtype=jnp.float32)
        b0 = jax.random.normal(k_b0, (1,), dtype=jnp.float32)

        out = jax.block_until_ready(cosine_activation_forward(tau, w, b, w0, b0))
        ref = reference_forward(tau, w, b, w0, b0)
        assert out.shape == (n, hidden_dim), (out.shape, (n, hidden_dim))
        assert jnp.allclose(out, ref, atol=1e-4, rtol=1e-4), "mismatch vs reference"

    print("KERNEL_OK")
</pallas_src>

<mosaic_0001>
module attributes {stable_mosaic.version = 11 : i64} {
  func.func @cosine_t2v_kernel(%arg0: i32, %arg1: memref<50x8xf32, #tpu.memory_space<vmem>>, %arg2: memref<8x128xf32, #tpu.memory_space<vmem>>, %arg3: memref<1x128xf32, #tpu.memory_space<vmem>>, %arg4: memref<50x128xf32, #tpu.memory_space<vmem>>) attributes {dimension_semantics = [#tpu.dimension_semantics<parallel>], iteration_bounds = array<i64: 1>, scalar_prefetch = 0 : i64, scratch_operands = 0 : i64, tpu.core_type = #tpu.core_type<tc>, window_params = [{transform_indices = @transform_0, window_bounds = array<i64: 50, 8>}, {pipeline_mode = #tpu.pipeline_mode<synchronous>, transform_indices = @transform_1, window_bounds = array<i64: 8, 128>}, {pipeline_mode = #tpu.pipeline_mode<synchronous>, transform_indices = @transform_2, window_bounds = array<i64: 1, 128>}, {transform_indices = @transform_3, window_bounds = array<i64: 50, 128>}]} {
    %c0 = arith.constant 0 : index
    %c0_0 = arith.constant 0 : index
    %0 = vector.load %arg1[%c0, %c0_0] : memref<50x8xf32, #tpu.memory_space<vmem>>, vector<50x8xf32>
    %c0_1 = arith.constant 0 : index
    %c0_2 = arith.constant 0 : index
    %1 = vector.load %arg2[%c0_1, %c0_2] : memref<8x128xf32, #tpu.memory_space<vmem>>, vector<8x128xf32>
    %cst = arith.constant dense<0.000000e+00> : vector<50x128xf32>
    %2 = tpu.matmul %0, %1, %cst {dimension_numbers = #tpu.dot_dimension_numbers<[1], [0], [0], [1], [0, 0, 1, 1], [], []>} : vector<50x8xf32>, vector<8x128xf32>, vector<50x128xf32> -> vector<50x128xf32>
    %c0_3 = arith.constant 0 : index
    %c0_4 = arith.constant 0 : index
    %3 = vector.load %arg3[%c0_3, %c0_4] : memref<1x128xf32, #tpu.memory_space<vmem>>, vector<1x128xf32>
    %cst_5 = arith.constant 5.000000e-01 : f32
    %4 = vector.broadcast %cst_5 : f32 to vector<1x128xf32>
    %5 = arith.cmpf ogt, %3, %4 : vector<1x128xf32>
    %6 = math.cos %2 : vector<50x128xf32>
    %7 = vector.shape_cast %5 : vector<1x128xi1> to vector<1x128xi1>
    %8 = vector.broadcast %7 : vector<1x128xi1> to vector<50x128xi1>
    %9 = arith.select %8, %6, %2 : vector<50x128xi1>, vector<50x128xf32>
    %c0_6 = arith.constant 0 : index
    %c0_7 = arith.constant 0 : index
    %10 = vector.load %arg4[%c0_6, %c0_7] : memref<50x128xf32, #tpu.memory_space<vmem>>, vector<50x128xf32>
    tpu.vector_store %arg4[%c0_6, %c0_7], %9 {strides = array<i32>} : memref<50x128xf32, #tpu.memory_space<vmem>>, vector<50x128xf32>,
    return
  }
  func.func @transform_0(%arg0: i32) -> (i32, i32) {
    %c0_i32 = arith.constant 0 : i32
    %c0_i32_0 = arith.constant 0 : i32
    return %arg0, %c0_i32 : i32, i32
  }
  func.func @transform_1(%arg0: i32) -> (i32, i32) {
    %c0_i32 = arith.constant 0 : i32
    %c0_i32_0 = arith.constant 0 : i32
    %c0_i32_1 = arith.constant 0 : i32
    return %c0_i32, %c0_i32_0 : i32, i32
  }
  func.func @transform_2(%arg0: i32) -> (i32, i32) {
    %c0_i32 = arith.constant 0 : i32
    %c0_i32_0 = arith.constant 0 : i32
    %c0_i32_1 = arith.constant 0 : i32
    return %c0_i32, %c0_i32_0 : i32, i32
  }
  func.func @transform_3(%arg0: i32) -> (i32, i32) {
    %c0_i32 = arith.constant 0 : i32
    %c0_i32_0 = arith.constant 0 : i32
    return %arg0, %c0_i32 : i32, i32
  }
}

</mosaic_0001>

<llo_original>
// kernel: tile.6
$region0: #{tile.6}
  #allocation0 [shape = 's32[1]{0}', space=sflag, size = 0x4, scoped, tag = 'scoped memory for tile.6']
  %s0 = inlined_call_operand.vmem [shape: f32[32], index: 0, kind: input, shape index: {}]
  %s1 = inlined_call_operand.vmem [shape: f32[4,32], index: 1, kind: output, shape index: {}]
  // Predicated region
  $region2: #{tile.6} parent=0 // pred_check
    _
  $region3: #{tile.6} parent=0 // pred_check_branch
    %3 = sbr.rel (0) target = $region5
  $region4: #{tile.6} parent=0 // pred_region
    _
  $region5: #{tile.6} parent=0 // pred_fallthru
    _
  %v4 = vld [vmem:[%s0] ss:$0 sm:$0xff]
  %5 = vst [vmem:[%s1] sm:$0xf] %v4

// kernel: tile.7
$region0: #{tile.7}
  %s0 = inlined_call_operand.vmem [shape: f32[4,32], index: 0, kind: input, shape index: {}]
  %s1 = inlined_call_operand.vmem [shape: f32[1,128], index: 1, kind: output, shape index: {}]
  $region1: #{tile.7} parent=0
    #allocation0 [shape = 'u8[4096]{0}', space=vmem, size = 0x1000, scoped, tag = 'scoped mem for output reshape']
    #allocation1 [shape = 'u8[4096]{0}', space=vmem, size = 0x1000, scoped, tag = 'scoped mem for input reshape']
    %s3 = sshll.u32 1, 4
    %s4 = ssub.s32 %s3, 1
    %v5 = vld [vmem:[%s0] sm:%s4]
    %6 = vst [vmem:[#allocation1] sm:%s4] %v5
    %v7 = vld [vmem:[#allocation1] sm:$0x1]
    %vm8 = vcmask 261120
    %9 = vst.msk [vmem:[#allocation0] sm:$0x1] %vm8, %v7
    %s10 = scalar_lea.vmem [#allocation1], 3
    %v11 = vld [vmem:[%s10] sm:$0x1]
    %12 = vrot.lane.b32.xlu0 %v11, 96
    %v13 = vpop.permute.xlu0 %12
    %vm14 = vcmask 1048320
    %15 = vst.msk [vmem:[#allocation0] sm:$0x1] %vm14, %v13
    %s16 = scalar_lea.vmem [#allocation1], 2
    %v17 = vld [vmem:[%s16] sm:$0x1]
    %18 = vrot.lane.b32.xlu0 %v17, 64
    %v19 = vpop.permute.xlu0 %18
    %vm20 = vcmask 785920
    %21 = vst.msk [vmem:[#allocation0] sm:$0x1] %vm20, %v19
    %s22 = scalar_lea.vmem [#allocation1], 1
    %v23 = vld [vmem:[%s22] sm:$0x1]
    %24 = vrot.lane.b32.xlu0 %v23, 32
    %v25 = vpop.permute.xlu0 %24
    %vm26 = vcmask 523520
    %27 = vst.msk [vmem:[#allocation0] sm:$0x1] %vm26, %v25
    %s29 = sshll.u32 1, 1
    %s30 = ssub.s32 %s29, 1
    %v32 = vld [vmem:[#allocation0] sm:%s30]
    %s33 = sshll.u32 1, 1
    %s34 = ssub.s32 %s33, 1
    %35 = vst [vmem:[%s1] sm:%s34] %v32

// kernel: cosine_activation_forward.1
$region0: #{cosine_activation_forward.1}
  #allocation0 [shape = 'u32[]', space=smem, size = 0x4, offset = 0x4, fixed_abs, tag = 'smem constant byte address 0x4 - core index']
  #allocation1 [shape = 'u32[144,128]{1,0:T(1,128)}', space=vmem, size = 0x12000, scoped, tag = 'internal scratch']
  %s0 = inlined_call_operand.vmem [shape: f32[50,8], index: 0, kind: input, shape index: {}]
  %s1 = inlined_call_operand.vmem [shape: f32[8,128], index: 1, kind: input, shape index: {}]
  %s2 = inlined_call_operand.vmem [shape: f32[1,128], index: 2, kind: input, shape index: {}]
  %s3 = inlined_call_operand.vmem [shape: f32[50,128], index: 3, kind: output, shape index: {}]
  %s4 = sld [smem:[#allocation0]]
  $region22: #{cosine_activation_forward.1} parent=0
    _
  %s6 = ssub.s32 1, %s4
  %s7 = scalar_select 0, %s6, %s4
  // Predicated region
  $region2: #{cosine_activation_forward.1} parent=0 // pred_check
    _
  $region3: #{cosine_activation_forward.1} parent=0 // pred_check_branch
    %9 = sbr.rel (0) target = $region5
  $region4: #{cosine_activation_forward.1} parent=0 // pred_region
    _
  $region5: #{cosine_activation_forward.1} parent=0 // pred_fallthru
    _
  // Predicated region
  $region6: #{cosine_activation_forward.1} parent=0 // pred_check
    _
  $region7: #{cosine_activation_forward.1} parent=0 // pred_check_branch
    %11 = sbr.rel (0) target = $region9
  $region8: #{cosine_activation_forward.1} parent=0 // pred_region
    _
  $region9: #{cosine_activation_forward.1} parent=0 // pred_fallthru
    _
  // Predicated region
  $region10: #{cosine_activation_forward.1} parent=0 // pred_check
    _
  $region11: #{cosine_activation_forward.1} parent=0 // pred_check_branch
    %13 = sbr.rel (0) target = $region13
  $region12: #{cosine_activation_forward.1} parent=0 // pred_region
    _
  $region13: #{cosine_activation_forward.1} parent=0 // pred_fallthru
    _
  %v14 = vld [vmem:[%s0] sm:$0xff]
  %v15 = vld [vmem:[%s0 + $0x8] sm:$0xff]
  %v16 = vld [vmem:[%s0 + $0x10] sm:$0xff]
  %v17 = vld [vmem:[%s0 + $0x18] sm:$0xff]
  %v18 = vld [vmem:[%s0 + $0x20] sm:$0xff]
  %v19 = vld [vmem:[%s0 + $0x28] sm:$0xff]
  %v20 = vld [vmem:[%s0 + $0x30] sm:$0x3]
  %v21 = vld [vmem:[%s1] sm:$0xff]
  %vm22 = vcmask 64512
  %v24 = vsel %vm22, %v14, 0
  %v27 = vsel %vm22, %v15, 0
  %v30 = vsel %vm22, %v16, 0
  %v33 = vsel %vm22, %v17, 0
  %v36 = vsel %vm22, %v18, 0
  %v39 = vsel %vm22, %v19, 0
  %v42 = vsel %vm22, %v20, 0
  %44 = vmatprep.subr.mxu0 0.0
  %45 = vmatpush1.msra.mxu0 0.0
  %46 = vmatprep.subr.mxu0 0.0
  %47 = vmatpush1.msra.mxu0 0.0
  %48 = vmatprep.subr.mxu0 0.0
  %49 = vmatpush1.msra.mxu0 0.0
  %50 = vmatprep.subr.mxu0 0.0
  %51 = vmatpush1.msra.mxu0 0.0
  %52 = vmatprep.subr.mxu0 0.0
  %53 = vmatpush1.msra.mxu0 0.0
  %54 = vmatprep.subr.mxu0 0.0
  %55 = vmatpush1.msra.mxu0 0.0
  %56 = vmatprep.subr.mxu0 0.0
  %57 = vmatpush1.msra.mxu0 0.0
  %58 = vmatprep.subr.mxu0 0.0
  %59 = vmatpush1.msra.mxu0 0.0
  %60 = vmatprep.subr.mxu0 0.0
  %61 = vmatpush1.msra.mxu0 0.0
  %62 = vmatprep.subr.mxu0 0.0
  %63 = vmatpush1.msra.mxu0 0.0
  %64 = vmatprep.subr.mxu0 0.0
  %65 = vmatpush1.msra.mxu0 0.0
  %66 = vmatprep.subr.mxu0 0.0
  %67 = vmatpush1.msra.mxu0 0.0
  %68 = vmatprep.subr.mxu0 0.0
  %69 = vmatpush1.msra.mxu0 0.0
  %70 = vmatprep.subr.mxu0 0.0
  %71 = vmatpush1.msra.mxu0 0.0
  %72 = vmatprep.subr.mxu0 0.0
  %73 = vmatpush1.msra.mxu0 0.0
  %74 = vmatprep.subr.mxu0 0.0
  %75 = vmatpush1.msra.mxu0 %v21
  %76 = vmatprep.subr.mxu0 0.0
  %77 = vmatpush2.msra.mxu0 0.0
  %78 = vmatprep.subr.mxu0 0.0
  %79 = vmatpush2.msra.mxu0 0.0
  %80 = vmatprep.subr.mxu0 0.0
  %81 = vmatpush2.msra.mxu0 0.0
  %82 = vmatprep.subr.mxu0 0.0
  %83 = vmatpush2.msra.mxu0 0.0
  %84 = vmatprep.subr.mxu0 0.0
  %85 = vmatpush2.msra.mxu0 0.0
  %86 = vmatprep.subr.mxu0 0.0
  %87 = vmatpush2.msra.mxu0 0.0
  %88 = vmatprep.subr.mxu0 0.0
  %89 = vmatpush2.msra.mxu0 0.0
  %90 = vmatprep.subr.mxu0 0.0
  %91 = vmatpush2.msra.mxu0 0.0
  %92 = vmatprep.subr.mxu0 0.0
  %93 = vmatpush2.msra.mxu0 0.0
  %94 = vmatprep.subr.mxu0 0.0
  %95 = vmatpush2.msra.mxu0 0.0
  %96 = vmatprep.subr.mxu0 0.0
  %97 = vmatpush2.msra.mxu0 0.0
  %98 = vmatprep.subr.mxu0 0.0
  %99 = vmatpush2.msra.mxu0 0.0
  %100 = vmatprep.subr.mxu0 0.0
  %101 = vmatpush2.msra.mxu0 0.0
  %102 = vmatprep.subr.mxu0 0.0
  %103 = vmatpush2.msra.mxu0 0.0
  %104 = vmatprep.subr.mxu0 0.0
  %105 = vmatpush2.msra.mxu0 0.0
  %106 = vmatprep.subr.mxu0 0.0
  %107 = vmatpush2.msra.mxu0 0.0
  %108 = vmatprep.mubr.f32.mxu0 0.0
  %109 = vmatmul.mubr.f32.gmra.mxu0 %v24
  %v110 = vpop.f32.mrf.mxu0
  %v111 = vadd.f32 0.0, %v110
  %v112 = vpop.f32.mrf.mxu0
  %113 = vmatprep.mubr.f32.mxu0 0.0
  %114 = vmatmul.mubr.f32.gmra.mxu0 %v27
  %v115 = vpop.f32.mrf.mxu0
  %v116 = vadd.f32 0.0, %v115
  %v117 = vpop.f32.mrf.mxu0
  %118 = vmatprep.mubr.f32.mxu0 0.0
  %119 = vmatmul.mubr.f32.gmra.mxu0 %v30
  %v120 = vpop.f32.mrf.mxu0
  %v121 = vadd.f32 0.0, %v120
  %v122 = vpop.f32.mrf.mxu0
  %123 = vmatprep.mubr.f32.mxu0 0.0
  %124 = vmatmul.mubr.f32.gmra.mxu0 %v33
  %v125 = vpop.f32.mrf.mxu0
  %v126 = vadd.f32 0.0, %v125
  %v127 = vpop.f32.mrf.mxu0
  %128 = vmatprep.mubr.f32.mxu0 0.0
  %129 = vmatmul.mubr.f32.gmra.mxu0 %v36
  %v130 = vpop.f32.mrf.mxu0
  %v131 = vadd.f32 0.0, %v130
  %v132 = vpop.f32.mrf.mxu0
  %133 = vmatprep.mubr.f32.mxu0 0.0
  %134 = vmatmul.mubr.f32.gmra.mxu0 %v39
  %v135 = vpop.f32.mrf.mxu0
  %v136 = vadd.f32 0.0, %v135
  %v137 = vpop.f32.mrf.mxu0
  %138 = vmatprep.mubr.f32.mxu0 0.0
  %139 = vmatmul.mubr.f32.gmra.mxu0 %v42
  %v140 = vpop.f32.mrf.mxu0
  %v141 = vadd.f32 0.0, %v140
  %v142 = vpop.f32.mrf.mxu0
  %143 = vdwg.mxu0
  %v144 = vld [vmem:[%s2] sm:$0x1]
  %vm145 = vcmp.gt.f32.partialorder %v144, 0.5
  %v146 = vand.u32 2147483647, %v111
  %vm147 = vcmp.le.f32.partialorder %v146, 0.7853982
  %vm148 = vcmp.lt.s32.totalorder %v111, 0
  %v149 = vand.u32 %v111, 2139095040
  %v150 = vshrl.u32 %v149, 23
  %v151 = vsub.s32 %v150, 127
  %v152 = vand.u32 2147483647, %v111
  %v153 = vand.u32 %v152, 8388607
  %v154 = vor.u32 %v153, 8388608
  %v155 = vsub.s32 0, %v154
  %v156 = vadd.s32 %v151, 1
  %vm157 = vcmp.gt.s32.totalorder %v156, 0
  %v158 = vsel %vm157, %v156, 0
  %v159 = vshrl.u32 %v158, 5
  %v160 = vand.u32 %v158, 31
  %v161 = vsub.s32 32, %v160
  %v162 = vshrl.u32 683565275, %v161
  %v163 = vshll.u32 683565275, %v160
  %v164 = vshrl.u32 2475754826, %v161
  %v165 = vor.u32 %v163, %v164
  %v166 = vshll.u32 2475754826, %v160
  %v167 = vshrl.u32 2131351028, %v161
  %v168 = vor.u32 %v166, %v167
  %v169 = vshll.u32 2131351028, %v160
  %v170 = vshrl.u32 2102212464, %v161
  %v171 = vor.u32 %v169, %v170
  %v172 = vshll.u32 2102212464, %v160
  %v173 = vshrl.u32 920167782, %v161
  %v174 = vor.u32 %v172, %v173
  %v175 = vshll.u32 920167782, %v160
  %v176 = vshrl.u32 1326507024, %v161
  %v177 = vor.u32 %v175, %v176
  %vm178 = vcmp.lt.s32.totalorder %v159, 1
  %vm179 = vcmp.lt.s32.totalorder %v159, 2
  %vm180 = vcmp.lt.s32.totalorder %v159, 3
  %vm181 = vcmp.lt.s32.totalorder %v159, 4
  %v182 = vsel %vm178, %v162, %v165
  %v183 = vsel %vm181, %v171, 2102212464
  %v184 = vsel %vm180, %v168, %v183
  %v185 = vsel %vm179, %v182, %v184
  %v186 = vsel %vm178, %v165, %v168
  %v187 = vsel %vm181, %v174, 920167782
  %v188 = vsel %vm180, %v171, %v187
  %v189 = vsel %vm179, %v186, %v188
  %v190 = vsel %vm178, %v168, %v171
  %v191 = vsel %vm181, %v177, 1326507024
  %v192 = vsel %vm180, %v174, %v191
  %v193 = vsel %vm179, %v190, %v192
  %v194 = vshll.u32 %v154, 8
  %v195 = vmul.u32.u64.compose %v194, %v193
  %v196 = vextract.low.u32 %v195
  %v197 = vextract.high.u32 %v195
  %v198 = vmul.u32.u64.compose %v194, %v189
  %v199 = vextract.low.u32 %v198
  %v200 = vextract.high.u32 %v198
  %v201 = vmul.u32 %v194, %v185
  %v202 = vadd.s32 %v197, %v199
  %vm203 = vc.u32 %v197, %v199
  %v204 = vadd.s32 %v200, 1
  %v205 = vsel %vm203, %v204, %v200
  %v206 = vadd.s32 %v201, %v205
  %v207 = vadd.s32 %v206, 536870912
  %v208 = vshrl.u32 %v207, 30
  %v209 = vshll.u32 %v208, 30
  %v210 = vsub.s32 %v206, %v209
  %vm211 = vcmp.lt.s32.totalorder %v210, 0
  %v212 = vsub.s32 0, %v210
  %v213 = vsel %vm211, %v212, %v210
  %v214 = vclz %v213
  %v215 = vsub.s32 %v214, 2
  %vm216 = vcmp.gt.s32.totalorder 0, %v215
  %v217 = vsel %vm216, 0, %v215
  %v218 = vsub.s32 32, %v217
  %v219 = vshll.u32 %v210, %v217
  %v220 = vshrl.u32 %v202, %v218
  %v221 = vor.u32 %v219, %v220
  %v222 = vsub.s32 4294967266, %v217
  %v223 = vadd.s32 %v222, 127
  %v224 = vshll.u32 %v223, 23
  %v225 = vor.u32 4788187, %v224
  %v226 = vand.u32 2147483647, %v225
  %v228 = vcvt.s32.f32 %v221
  %v229 = vmul.f32 %v228, %v226
  %v230 = vxor.u32 %v229, 2147483648
  %v231 = vsel %vm148, %v230, %v229
  %v232 = vsub.s32 4, %v208
  %v233 = vsel %vm148, %v232, %v208
  %v234 = vsel %vm147, %v111, %v231
  %v235 = vsel %vm147, 0, %v233
  %v236 = vcosq.f32.pop %v234
  %v237 = vsinq.f32.pop %v234
  %vm238 = vweird.f32 %v111
  %v239 = vand.u32 %v235, 3
  %vm240 = vcmp.lt.s32.totalorder %v239, 2
  %vm241 = vcmp.eq.s32.totalorder %v239, 0
  %v242 = vxor.u32 %v237, 2147483648
  %v243 = vsel %vm241, %v236, %v242
  %vm244 = vcmp.eq.s32.totalorder %v239, 2
  %v245 = vxor.u32 %v236, 2147483648
  %v246 = vsel %vm244, %v245, %v237
  %v247 = vsel %vm240, %v243, %v246
  %v248 = vsel %vm238, nan, %v247
  %v249 = vand.u32 2147483647, %v116
  %vm250 = vcmp.le.f32.partialorder %v249, 0.7853982
  %vm251 = vcmp.lt.s32.totalorder %v116, 0
  %v252 = vand.u32 %v116, 2139095040
  %v253 = vshrl.u32 %v252, 23
  %v254 = vsub.s32 %v253, 127
  %v255 = vand.u32 2147483647, %v116
  %v256 = vand.u32 %v255, 8388607
  %v257 = vor.u32 %v256, 8388608
  %v258 = vsub.s32 0, %v257
  %v259 = vadd.s32 %v254, 1
  %vm260 = vcmp.gt.s32.totalorder %v259, 0
  %v261 = vsel %vm260, %v259, 0
  %v262 = vshrl.u32 %v261, 5
  %v263 = vand.u32 %v261, 31
  %v264 = vsub.s32 32, %v263
  %v265 = vshrl.u32 683565275, %v264
  %v266 = vshll.u32 683565275, %v263
  %v267 = vshrl.u32 2475754826, %v264
  %v268 = vor.u32 %v266, %v267
  %v269 = vshll.u32 2475754826, %v263
  %v270 = vshrl.u32 2131351028, %v264
  %v271 = vor.u32 %v269, %v270
  %v272 = vshll.u32 2131351028, %v263
  %v273 = vshrl.u32 2102212464, %v264
  %v274 = vor.u32 %v272, %v273
  %v275 = vshll.u32 2102212464, %v263
  %v276 = vshrl.u32 920167782, %v264
  %v277 = vor.u32 %v275, %v276
  %v278 = vshll.u32 920167782, %v263
  %v279 = vshrl.u32 1326507024, %v264
  %v280 = vor.u32 %v278, %v279
  %vm281 = vcmp.lt.s32.totalorder %v262, 1
  %vm282 = vcmp.lt.s32.totalorder %v262, 2
  %vm283 = vcmp.lt.s32.totalorder %v262, 3
  %vm284 = vcmp.lt.s32.totalorder %v262, 4
  %v285 = vsel %vm281, %v265, %v268
  %v286 = vsel %vm284, %v274, 2102212464
  %v287 = vsel %vm283, %v271, %v286
  %v288 = vsel %vm282, %v285, %v287
  %v289 = vsel %vm281, %v268, %v271
  %v290 = vsel %vm284, %v277, 920167782
  %v291 = vsel %vm283, %v274, %v290
  %v292 = vsel %vm282, %v289, %v291
  %v293 = vsel %vm281, %v271, %v274
  %v294 = vsel %vm284, %v280, 1326507024
  %v295 = vsel %vm283, %v277, %v294
  %v296 = vsel %vm282, %v293, %v295
  %v297 = vshll.u32 %v257, 8
  %v298 = vmul.u32.u64.compose %v297, %v296
  %v299 = vextract.low.u32 %v298
  %v300 = vextract.high.u32 %v298
  %v301 = vmul.u32.u64.compose %v297, %v292
  %v302 = vextract.low.u32 %v301
  %v303 = vextract.high.u32 %v301
  %v304 = vmul.u32 %v297, %v288
  %v305 = vadd.s32 %v300, %v302
  %vm306 = vc.u32 %v300, %v302
  %v307 = vadd.s32 %v303, 1
  %v308 = vsel %vm306, %v307, %v303
  %v309 = vadd.s32 %v304, %v308
  %v310 = vadd.s32 %v309, 536870912
  %v311 = vshrl.u32 %v310, 30
  %v312 = vshll.u32 %v311, 30
  %v313 = vsub.s32 %v309, %v312
  %vm314 = vcmp.lt.s32.totalorder %v313, 0
  %v315 = vsub.s32 0, %v313
  %v316 = vsel %vm314, %v315, %v313
  %v317 = vclz %v316
  %v318 = vsub.s32 %v317, 2
  %vm319 = vcmp.gt.s32.totalorder 0, %v318
  %v320 = vsel %vm319, 0, %v318
  %v321 = vsub.s32 32, %v320
  %v322 = vshll.u32 %v313, %v320
  %v323 = vshrl.u32 %v305, %v321
  %v324 = vor.u32 %v322, %v323
  %v325 = vsub.s32 4294967266, %v320
  %v326 = vadd.s32 %v325, 127
  %v327 = vshll.u32 %v326, 23
  %v328 = vor.u32 4788187, %v327
  %v329 = vand.u32 2147483647, %v328
  %v331 = vcvt.s32.f32 %v324
  %v332 = vmul.f32 %v331, %v329
  %v333 = vxor.u32 %v332, 2147483648
  %v334 = vsel %vm251, %v333, %v332
  %v335 = vsub.s32 4, %v311
  %v336 = vsel %vm251, %v335, %v311
  %v337 = vsel %vm250, %v116, %v334
  %v338 = vsel %vm250, 0, %v336
  %v339 = vcosq.f32.pop %v337
  %v340 = vsinq.f32.pop %v337
  %vm341 = vweird.f32 %v116
  %v342 = vand.u32 %v338, 3
  %vm343 = vcmp.lt.s32.totalorder %v342, 2
  %vm344 = vcmp.eq.s32.totalorder %v342, 0
  %v345 = vxor.u32 %v340, 2147483648
  %v346 = vsel %vm344, %v339, %v345
  %vm347 = vcmp.eq.s32.totalorder %v342, 2
  %v348 = vxor.u32 %v339, 2147483648
  %v349 = vsel %vm347, %v348, %v340
  %v350 = vsel %vm343, %v346, %v349
  %v351 = vsel %vm341, nan, %v350
  %v352 = vand.u32 2147483647, %v121
  %vm353 = vcmp.le.f32.partialorder %v352, 0.7853982
  %vm354 = vcmp.lt.s32.totalorder %v121, 0
  %v355 = vand.u32 %v121, 2139095040
  %v356 = vshrl.u32 %v355, 23
  %v357 = vsub.s32 %v356, 127
  %v358 = vand.u32 2147483647, %v121
  %v359 = vand.u32 %v358, 8388607
  %v360 = vor.u32 %v359, 8388608
  %v361 = vsub.s32 0, %v360
  %v362 = vadd.s32 %v357, 1
  %vm363 = vcmp.gt.s32.totalorder %v362, 0
  %v364 = vsel %vm363, %v362, 0
  %v365 = vshrl.u32 %v364, 5
  %v366 = vand.u32 %v364, 31
  %v367 = vsub.s32 32, %v366
  %v368 = vshrl.u32 683565275, %v367
  %v369 = vshll.u32 683565275, %v366
  %v370 = vshrl.u32 2475754826, %v367
  %v371 = vor.u32 %v369, %v370
  %v372 = vshll.u32 2475754826, %v366
  %v373 = vshrl.u32 2131351028, %v367
  %v374 = vor.u32 %v372, %v373
  %v375 = vshll.u32 2131351028, %v366
  %v376 = vshrl.u32 2102212464, %v367
  %v377 = vor.u32 %v375, %v376
  %v378 = vshll.u32 2102212464, %v366
  %v379 = vshrl.u32 920167782, %v367
  %v380 = vor.u32 %v378, %v379
  %v381 = vshll.u32 920167782, %v366
  %v382 = vshrl.u32 1326507024, %v367
  %v383 = vor.u32 %v381, %v382
  %vm384 = vcmp.lt.s32.totalorder %v365, 1
  %vm385 = vcmp.lt.s32.totalorder %v365, 2
  %vm386 = vcmp.lt.s32.totalorder %v365, 3
  %vm387 = vcmp.lt.s32.totalorder %v365, 4
  %v388 = vsel %vm384, %v368, %v371
  %v389 = vsel %vm387, %v377, 2102212464
  %v390 = vsel %vm386, %v374, %v389
  %v391 = vsel %vm385, %v388, %v390
  %v392 = vsel %vm384, %v371, %v374
  %v393 = vsel %vm387, %v380, 920167782
  %v394 = vsel %vm386, %v377, %v393
  %v395 = vsel %vm385, %v392, %v394
  %v396 = vsel %vm384, %v374, %v377
  %v397 = vsel %vm387, %v383, 1326507024
  %v398 = vsel %vm386, %v380, %v397
  %v399 = vsel %vm385, %v396, %v398
  %v400 = vshll.u32 %v360, 8
  %v401 = vmul.u32.u64.compose %v400, %v399
  %v402 = vextract.low.u32 %v401
  %v403 = vextract.high.u32 %v401
  %v404 = vmul.u32.u64.compose %v400, %v395
  %v405 = vextract.low.u32 %v404
  %v406 = vextract.high.u32 %v404
  %v407 = vmul.u32 %v400, %v391
  %v408 = vadd.s32 %v403, %v405
  %vm409 = vc.u32 %v403, %v405
  %v410 = vadd.s32 %v406, 1
  %v411 = vsel %vm409, %v410, %v406
  %v412 = vadd.s32 %v407, %v411
  %v413 = vadd.s32 %v412, 536870912
  %v414 = vshrl.u32 %v413, 30
  %v415 = vshll.u32 %v414, 30
  %v416 = vsub.s32 %v412, %v415
  %vm417 = vcmp.lt.s32.totalorder %v416, 0
  %v418 = vsub.s32 0, %v416
  %v419 = vsel %vm417, %v418, %v416
  %v420 = vclz %v419
  %v421 = vsub.s32 %v420, 2
  %vm422 = vcmp.gt.s32.totalorder 0, %v421
  %v423 = vsel %vm422, 0, %v421
  %v424 = vsub.s32 32, %v423
  %v425 = vshll.u32 %v416, %v423
  %v426 = vshrl.u32 %v408, %v424
  %v427 = vor.u32 %v425, %v426
  %v428 = vsub.s32 4294967266, %v423
  %v429 = vadd.s32 %v428, 127
  %v430 = vshll.u32 %v429, 23
  %v431 = vor.u32 4788187, %v430
  %v432 = vand.u32 2147483647, %v431
  %v434 = vcvt.s32.f32 %v427
  %v435 = vmul.f32 %v434, %v432
  %v436 = vxor.u32 %v435, 2147483648
  %v437 = vsel %vm354, %v436, %v435
  %v438 = vsub.s32 4, %v414
  %v439 = vsel %vm354, %v438, %v414
  %v440 = vsel %vm353, %v121, %v437
  %v441 = vsel %vm353, 0, %v439
  %v442 = vcosq.f32.pop %v440
  %v443 = vsinq.f32.pop %v440
  %vm444 = vweird.f32 %v121
  %v445 = vand.u32 %v441, 3
  %vm446 = vcmp.lt.s32.totalorder %v445, 2
  %vm447 = vcmp.eq.s32.totalorder %v445, 0
  %v448 = vxor.u32 %v443, 2147483648
  %v449 = vsel %vm447, %v442, %v448
  %vm450 = vcmp.eq.s32.totalorder %v445, 2
  %v451 = vxor.u32 %v442, 2147483648
  %v452 = vsel %vm450, %v451, %v443
  %v453 = vsel %vm446, %v449, %v452
  %v454 = vsel %vm444, nan, %v453
  %v455 = vand.u32 2147483647, %v126
  %vm456 = vcmp.le.f32.partialorder %v455, 0.7853982
  %vm457 = vcmp.lt.s32.totalorder %v126, 0
  %v458 = vand.u32 %v126, 2139095040
  %v459 = vshrl.u32 %v458, 23
  %v460 = vsub.s32 %v459, 127
  %v461 = vand.u32 2147483647, %v126
  %v462 = vand.u32 %v461, 8388607
  %v463 = vor.u32 %v462, 8388608
  %v464 = vsub.s32 0, %v463
  %v465 = vadd.s32 %v460, 1
  %vm466 = vcmp.gt.s32.totalorder %v465, 0
  %v467 = vsel %vm466, %v465, 0
  %v468 = vshrl.u32 %v467, 5
  %v469 = vand.u32 %v467, 31
  %v470 = vsub.s32 32, %v469
  %v471 = vshrl.u32 683565275, %v470
  %v472 = vshll.u32 683565275, %v469
  %v473 = vshrl.u32 2475754826, %v470
  %v474 = vor.u32 %v472, %v473
  %v475 = vshll.u32 2475754826, %v469
  %v476 = vshrl.u32 2131351028, %v470
  %v477 = vor.u32 %v475, %v476
  %v478 = vshll.u32 2131351028, %v469
  %v479 = vshrl.u32 2102212464, %v470
  %v480 = vor.u32 %v478, %v479
  %v481 = vshll.u32 2102212464, %v469
  %v482 = vshrl.u32 920167782, %v470
  %v483 = vor.u32 %v481, %v482
  %v484 = vshll.u32 920167782, %v469
  %v485 = vshrl.u32 1326507024, %v470
  %v486 = vor.u32 %v484, %v485
  %vm487 = vcmp.lt.s32.totalorder %v468, 1
  %vm488 = vcmp.lt.s32.totalorder %v468, 2
  %vm489 = vcmp.lt.s32.totalorder %v468, 3
  %vm490 = vcmp.lt.s32.totalorder %v468, 4
  %v491 = vsel %vm487, %v471, %v474
  %v492 = vsel %vm490, %v480, 2102212464
  %v493 = vsel %vm489, %v477, %v492
  %v494 = vsel %vm488, %v491, %v493
  %v495 = vsel %vm487, %v474, %v477
  %v496 = vsel %vm490, %v483, 920167782
  %v497 = vsel %vm489, %v480, %v496
  %v498 = vsel %vm488, %v495, %v497
  %v499 = vsel %vm487, %v477, %v480
  %v500 = vsel %vm490, %v486, 1326507024
  %v501 = vsel %vm489, %v483, %v500
  %v502 = vsel %vm488, %v499, %v501
  %v503 = vshll.u32 %v463, 8
  %v504 = vmul.u32.u64.compose %v503, %v502
  %v505 = vextract.low.u32 %v504
  %v506 = vextract.high.u32 %v504
  %v507 = vmul.u32.u64.compose %v503, %v498
  %v508 = vextract.low.u32 %v507
  %v509 = vextract.high.u32 %v507
  %v510 = vmul.u32 %v503, %v494
  %v511 = vadd.s32 %v506, %v508
  %vm512 = vc.u32 %v506, %v508
  %v513 = vadd.s32 %v509, 1
  %v514 = vsel %vm512, %v513, %v509
  %v515 = vadd.s32 %v510, %v514
  %v516 = vadd.s32 %v515, 536870912
  %v517 = vshrl.u32 %v516, 30
  %v518 = vshll.u32 %v517, 30
  %v519 = vsub.s32 %v515, %v518
  %vm520 = vcmp.lt.s32.totalorder %v519, 0
  %v521 = vsub.s32 0, %v519
  %v522 = vsel %vm520, %v521, %v519
  %v523 = vclz %v522
  %v524 = vsub.s32 %v523, 2
  %vm525 = vcmp.gt.s32.totalorder 0, %v524
  %v526 = vsel %vm525, 0, %v524
  %v527 = vsub.s32 32, %v526
  %v528 = vshll.u32 %v519, %v526
  %v529 = vshrl.u32 %v511, %v527
  %v530 = vor.u32 %v528, %v529
  %v531 = vsub.s32 4294967266, %v526
  %v532 = vadd.s32 %v531, 127
  %v533 = vshll.u32 %v532, 23
  %v534 = vor.u32 4788187, %v533
  %v535 = vand.u32 2147483647, %v534
  %v537 = vcvt.s32.f32 %v530
  %v538 = vmul.f32 %v537, %v535
  %v539 = vxor.u32 %v538, 2147483648
  %v540 = vsel %vm457, %v539, %v538
  %v541 = vsub.s32 4, %v517
  %v542 = vsel %vm457, %v541, %v517
  %v543 = vsel %vm456, %v126, %v540
  %v544 = vsel %vm456, 0, %v542
  %v545 = vcosq.f32.pop %v543
  %v546 = vsinq.f32.pop %v543
  %vm547 = vweird.f32 %v126
  %v548 = vand.u32 %v544, 3
  %vm549 = vcmp.lt.s32.totalorder %v548, 2
  %vm550 = vcmp.eq.s32.totalorder %v548, 0
  %v551 = vxor.u32 %v546, 2147483648
  %v552 = vsel %vm550, %v545, %v551
  %vm553 = vcmp.eq.s32.totalorder %v548, 2
  %v554 = vxor.u32 %v545, 2147483648
  %v555 = vsel %vm553, %v554, %v546
  %v556 = vsel %vm549, %v552, %v555
  %v557 = vsel %vm547, nan, %v556
  %v558 = vand.u32 2147483647, %v131
  %vm559 = vcmp.le.f32.partialorder %v558, 0.7853982
  %vm560 = vcmp.lt.s32.totalorder %v131, 0
  %v561 = vand.u32 %v131, 2139095040
  %v562 = vshrl.u32 %v561, 23
  %v563 = vsub.s32 %v562, 127
  %v564 = vand.u32 2147483647, %v131
  %v565 = vand.u32 %v564, 8388607
  %v566 = vor.u32 %v565, 8388608
  %v567 = vsub.s32 0, %v566
  %v568 = vadd.s32 %v563, 1
  %vm569 = vcmp.gt.s32.totalorder %v568, 0
  %v570 = vsel %vm569, %v568, 0
  %v571 = vshrl.u32 %v570, 5
  %v572 = vand.u32 %v570, 31
  %v573 = vsub.s32 32, %v572
  %v574 = vshrl.u32 683565275, %v573
  %v575 = vshll.u32 683565275, %v572
  %v576 = vshrl.u32 2475754826, %v573
  %v577 = vor.u32 %v575, %v576
  %v578 = vshll.u32 2475754826, %v572
  %v579 = vshrl.u32 2131351028, %v573
  %v580 = vor.u32 %v578, %v579
  %v581 = vshll.u32 2131351028, %v572
  %v582 = vshrl.u32 2102212464, %v573
  %v583 = vor.u32 %v581, %v582
  %v584 = vshll.u32 2102212464, %v572
  %v585 = vshrl.u32 920167782, %v573
  %v586 = vor.u32 %v584, %v585
  %v587 = vshll.u32 920167782, %v572
  %v588 = vshrl.u32 1326507024, %v573
  %v589 = vor.u32 %v587, %v588
  %vm590 = vcmp.lt.s32.totalorder %v571, 1
  %vm591 = vcmp.lt.s32.totalorder %v571, 2
  %vm592 = vcmp.lt.s32.totalorder %v571, 3
  %vm593 = vcmp.lt.s32.totalorder %v571, 4
  %v594 = vsel %vm590, %v574, %v577
  %v595 = vsel %vm593, %v583, 2102212464
  %v596 = vsel %vm592, %v580, %v595
  %v597 = vsel %vm591, %v594, %v596
  %v598 = vsel %vm590, %v577, %v580
  %v599 = vsel %vm593, %v586, 920167782
  %v600 = vsel %vm592, %v583, %v599
  %v601 = vsel %vm591, %v598, %v600
  %v602 = vsel %vm590, %v580, %v583
  %v603 = vsel %vm593, %v589, 1326507024
  %v604 = vsel %vm592, %v586, %v603
  %v605 = vsel %vm591, %v602, %v604
  %v606 = vshll.u32 %v566, 8
  %v607 = vmul.u32.u64.compose %v606, %v605
  %v608 = vextract.low.u32 %v607
  %v609 = vextract.high.u32 %v607
  %v610 = vmul.u32.u64.compose %v606, %v601
  %v611 = vextract.low.u32 %v610
  %v612 = vextract.high.u32 %v610
  %v613 = vmul.u32 %v606, %v597
  %v614 = vadd.s32 %v609, %v611
  %vm615 = vc.u32 %v609, %v611
  %v616 = vadd.s32 %v612, 1
  %v617 = vsel %vm615, %v616, %v612
  %v618 = vadd.s32 %v613, %v617
  %v619 = vadd.s32 %v618, 536870912
  %v620 = vshrl.u32 %v619, 30
  %v621 = vshll.u32 %v620, 30
  %v622 = vsub.s32 %v618, %v621
  %vm623 = vcmp.lt.s32.totalorder %v622, 0
  %v624 = vsub.s32 0, %v622
  %v625 = vsel %vm623, %v624, %v622
  %v626 = vclz %v625
  %v627 = vsub.s32 %v626, 2
  %vm628 = vcmp.gt.s32.totalorder 0, %v627
  %v629 = vsel %vm628, 0, %v627
  %v630 = vsub.s32 32, %v629
  %v631 = vshll.u32 %v622, %v629
  %v632 = vshrl.u32 %v614, %v630
  %v633 = vor.u32 %v631, %v632
  %v634 = vsub.s32 4294967266, %v629
  %v635 = vadd.s32 %v634, 127
  %v636 = vshll.u32 %v635, 23
  %v637 = vor.u32 4788187, %v636
  %v638 = vand.u32 2147483647, %v637
  %v640 = vcvt.s32.f32 %v633
  %v641 = vmul.f32 %v640, %v638
  %v642 = vxor.u32 %v641, 2147483648
  %v643 = vsel %vm560, %v642, %v641
  %v644 = vsub.s32 4, %v620
  %v645 = vsel %vm560, %v644, %v620
  %v646 = vsel %vm559, %v131, %v643
  %v647 = vsel %vm559, 0, %v645
  %v648 = vcosq.f32.pop %v646
  %v649 = vsinq.f32.pop %v646
  %vm650 = vweird.f32 %v131
  %v651 = vand.u32 %v647, 3
  %vm652 = vcmp.lt.s32.totalorder %v651, 2
  %vm653 = vcmp.eq.s32.totalorder %v651, 0
  %v654 = vxor.u32 %v649, 2147483648
  %v655 = vsel %vm653, %v648, %v654
  %vm656 = vcmp.eq.s32.totalorder %v651, 2
  %v657 = vxor.u32 %v648, 2147483648
  %v658 = vsel %vm656, %v657, %v649
  %v659 = vsel %vm652, %v655, %v658
  %v660 = vsel %vm650, nan, %v659
  %v661 = vand.u32 2147483647, %v136
  %vm662 = vcmp.le.f32.partialorder %v661, 0.7853982
  %vm663 = vcmp.lt.s32.totalorder %v136, 0
  %v664 = vand.u32 %v136, 2139095040
  %v665 = vshrl.u32 %v664, 23
  %v666 = vsub.s32 %v665, 127
  %v667 = vand.u32 2147483647, %v136
  %v668 = vand.u32 %v667, 8388607
  %v669 = vor.u32 %v668, 8388608
  %v670 = vsub.s32 0, %v669
  %v671 = vadd.s32 %v666, 1
  %vm672 = vcmp.gt.s32.totalorder %v671, 0
  %v673 = vsel %vm672, %v671, 0
  %v674 = vshrl.u32 %v673, 5
  %v675 = vand.u32 %v673, 31
  %v676 = vsub.s32 32, %v675
  %v677 = vshrl.u32 683565275, %v676
  %v678 = vshll.u32 683565275, %v675
  %v679 = vshrl.u32 2475754826, %v676
  %v680 = vor.u32 %v678, %v679
  %v681 = vshll.u32 2475754826, %v675
  %v682 = vshrl.u32 2131351028, %v676
  %v683 = vor.u32 %v681, %v682
  %v684 = vshll.u32 2131351028, %v675
  %v685 = vshrl.u32 2102212464, %v676
  %v686 = vor.u32 %v684, %v685
  %v687 = vshll.u32 2102212464, %v675
  %v688 = vshrl.u32 920167782, %v676
  %v689 = vor.u32 %v687, %v688
  %v690 = vshll.u32 920167782, %v675
  %v691 = vshrl.u32 1326507024, %v676
  %v692 = vor.u32 %v690, %v691
  %vm693 = vcmp.lt.s32.totalorder %v674, 1
  %vm694 = vcmp.lt.s32.totalorder %v674, 2
  %vm695 = vcmp.lt.s32.totalorder %v674, 3
  %vm696 = vcmp.lt.s32.totalorder %v674, 4
  %v697 = vsel %vm693, %v677, %v680
  %v698 = vsel %vm696, %v686, 2102212464
  %v699 = vsel %vm695, %v683, %v698
  %v700 = vsel %vm694, %v697, %v699
  %v701 = vsel %vm693, %v680, %v683
  %v702 = vsel %vm696, %v689, 920167782
  %v703 = vsel %vm695, %v686, %v702
  %v704 = vsel %vm694, %v701, %v703
  %v705 = vsel %vm693, %v683, %v686
  %v706 = vsel %vm696, %v692, 1326507024
  %v707 = vsel %vm695, %v689, %v706
  %v708 = vsel %vm694, %v705, %v707
  %v709 = vshll.u32 %v669, 8
  %v710 = vmul.u32.u64.compose %v709, %v708
  %v711 = vextract.low.u32 %v710
  %v712 = vextract.high.u32 %v710
  %v713 = vmul.u32.u64.compose %v709, %v704
  %v714 = vextract.low.u32 %v713
  %v715 = vextract.high.u32 %v713
  %v716 = vmul.u32 %v709, %v700
  %v717 = vadd.s32 %v712, %v714
  %vm718 = vc.u32 %v712, %v714
  %v719 = vadd.s32 %v715, 1
  %v720 = vsel %vm718, %v719, %v715
  %v721 = vadd.s32 %v716, %v720
  %v722 = vadd.s32 %v721, 536870912
  %v723 = vshrl.u32 %v722, 30
  %v724 = vshll.u32 %v723, 30
  %v725 = vsub.s32 %v721, %v724
  %vm726 = vcmp.lt.s32.totalorder %v725, 0
  %v727 = vsub.s32 0, %v725
  %v728 = vsel %vm726, %v727, %v725
  %v729 = vclz %v728
  %v730 = vsub.s32 %v729, 2
  %vm731 = vcmp.gt.s32.totalorder 0, %v730
  %v732 = vsel %vm731, 0, %v730
  %v733 = vsub.s32 32, %v732
  %v734 = vshll.u32 %v725, %v732
  %v735 = vshrl.u32 %v717, %v733
  %v736 = vor.u32 %v734, %v735
  %v737 = vsub.s32 4294967266, %v732
  %v738 = vadd.s32 %v737, 127
  %v739 = vshll.u32 %v738, 23
  %v740 = vor.u32 4788187, %v739
  %v741 = vand.u32 2147483647, %v740
  %v743 = vcvt.s32.f32 %v736
  %v744 = vmul.f32 %v743, %v741
  %v745 = vxor.u32 %v744, 2147483648
  %v746 = vsel %vm663, %v745, %v744
  %v747 = vsub.s32 4, %v723
  %v748 = vsel %vm663, %v747, %v723
  %v749 = vsel %vm662, %v136, %v746
  %v750 = vsel %vm662, 0, %v748
  %v751 = vcosq.f32.pop %v749
  %v752 = vsinq.f32.pop %v749
  %vm753 = vweird.f32 %v136
  %v754 = vand.u32 %v750, 3
  %vm755 = vcmp.lt.s32.totalorder %v754, 2
  %vm756 = vcmp.eq.s32.totalorder %v754, 0
  %v757 = vxor.u32 %v752, 2147483648
  %v758 = vsel %vm756, %v751, %v757
  %vm759 = vcmp.eq.s32.totalorder %v754, 2
  %v760 = vxor.u32 %v751, 2147483648
  %v761 = vsel %vm759, %v760, %v752
  %v762 = vsel %vm755, %v758, %v761
  %v763 = vsel %vm753, nan, %v762
  %v764 = vand.u32 2147483647, %v141
  %vm765 = vcmp.le.f32.partialorder %v764, 0.7853982
  %vm766 = vcmp.lt.s32.totalorder %v141, 0
  %v767 = vand.u32 %v141, 2139095040
  %v768 = vshrl.u32 %v767, 23
  %v769 = vsub.s32 %v768, 127
  %v770 = vand.u32 2147483647, %v141
  %v771 = vand.u32 %v770, 8388607
  %v772 = vor.u32 %v771, 8388608
  %v773 = vsub.s32 0, %v772
  %v774 = vadd.s32 %v769, 1
  %vm775 = vcmp.gt.s32.totalorder %v774, 0
  %v776 = vsel %vm775, %v774, 0
  %v777 = vshrl.u32 %v776, 5
  %v778 = vand.u32 %v776, 31
  %v779 = vsub.s32 32, %v778
  %v780 = vshrl.u32 683565275, %v779
  %v781 = vshll.u32 683565275, %v778
  %v782 = vshrl.u32 2475754826, %v779
  %v783 = vor.u32 %v781, %v782
  %v784 = vshll.u32 2475754826, %v778
  %v785 = vshrl.u32 2131351028, %v779
  %v786 = vor.u32 %v784, %v785
  %v787 = vshll.u32 2131351028, %v778
  %v788 = vshrl.u32 2102212464, %v779
  %v789 = vor.u32 %v787, %v788
  %v790 = vshll.u32 2102212464, %v778
  %v791 = vshrl.u32 920167782, %v779
  %v792 = vor.u32 %v790, %v791
  %v793 = vshll.u32 920167782, %v778
  %v794 = vshrl.u32 1326507024, %v779
  %v795 = vor.u32 %v793, %v794
  %vm796 = vcmp.lt.s32.totalorder %v777, 1
  %vm797 = vcmp.lt.s32.totalorder %v777, 2
  %vm798 = vcmp.lt.s32.totalorder %v777, 3
  %vm799 = vcmp.lt.s32.totalorder %v777, 4
  %v800 = vsel %vm796, %v780, %v783
  %v801 = vsel %vm799, %v789, 2102212464
  %v802 = vsel %vm798, %v786, %v801
  %v803 = vsel %vm797, %v800, %v802
  %v804 = vsel %vm796, %v783, %v786
  %v805 = vsel %vm799, %v792, 920167782
  %v806 = vsel %vm798, %v789, %v805
  %v807 = vsel %vm797, %v804, %v806
  %v808 = vsel %vm796, %v786, %v789
  %v809 = vsel %vm799, %v795, 1326507024
  %v810 = vsel %vm798, %v792, %v809
  %v811 = vsel %vm797, %v808, %v810
  %v812 = vshll.u32 %v772, 8
  %v813 = vmul.u32.u64.compose %v812, %v811
  %v814 = vextract.low.u32 %v813
  %v815 = vextract.high.u32 %v813
  %v816 = vmul.u32.u64.compose %v812, %v807
  %v817 = vextract.low.u32 %v816
  %v818 = vextract.high.u32 %v816
  %v819 = vmul.u32 %v812, %v803
  %v820 = vadd.s32 %v815, %v817
  %vm821 = vc.u32 %v815, %v817
  %v822 = vadd.s32 %v818, 1
  %v823 = vsel %vm821, %v822, %v818
  %v824 = vadd.s32 %v819, %v823
  %v825 = vadd.s32 %v824, 536870912
  %v826 = vshrl.u32 %v825, 30
  %v827 = vshll.u32 %v826, 30
  %v828 = vsub.s32 %v824, %v827
  %vm829 = vcmp.lt.s32.totalorder %v828, 0
  %v830 = vsub.s32 0, %v828
  %v831 = vsel %vm829, %v830, %v828
  %v832 = vclz %v831
  %v833 = vsub.s32 %v832, 2
  %vm834 = vcmp.gt.s32.totalorder 0, %v833
  %v835 = vsel %vm834, 0, %v833
  %v836 = vsub.s32 32, %v835
  %v837 = vshll.u32 %v828, %v835
  %v838 = vshrl.u32 %v820, %v836
  %v839 = vor.u32 %v837, %v838
  %v840 = vsub.s32 4294967266, %v835
  %v841 = vadd.s32 %v840, 127
  %v842 = vshll.u32 %v841, 23
  %v843 = vor.u32 4788187, %v842
  %v844 = vand.u32 2147483647, %v843
  %v846 = vcvt.s32.f32 %v839
  %v847 = vmul.f32 %v846, %v844
  %v848 = vxor.u32 %v847, 2147483648
  %v849 = vsel %vm766, %v848, %v847
  %v850 = vsub.s32 4, %v826
  %v851 = vsel %vm766, %v850, %v826
  %v852 = vsel %vm765, %v141, %v849
  %v853 = vsel %vm765, 0, %v851
  %v854 = vcosq.f32.pop %v852
  %v855 = vsinq.f32.pop %v852
  %vm856 = vweird.f32 %v141
  %v857 = vand.u32 %v853, 3
  %vm858 = vcmp.lt.s32.totalorder %v857, 2
  %vm859 = vcmp.eq.s32.totalorder %v857, 0
  %v860 = vxor.u32 %v855, 2147483648
  %v861 = vsel %vm859, %v854, %v860
  %vm862 = vcmp.eq.s32.totalorder %v857, 2
  %v863 = vxor.u32 %v854, 2147483648
  %v864 = vsel %vm862, %v863, %v855
  %v865 = vsel %vm858, %v861, %v864
  %v866 = vsel %vm856, nan, %v865
  %v867 = vsel %vm145, 1, 0
  %v868 = vlaneseq
  %v869 = vshrl.u32 %v868, 7
  %v870 = vsub.s32 0, %v869
  %v871 = vrot.slane %v867, %v870
  %vm872 = vcmp.eq.s32.totalorder %v871, 1
  %v873 = vsel %vm872, %v248, %v111
  %v874 = vsel %vm872, %v351, %v116
  %v875 = vsel %vm872, %v454, %v121
  %v876 = vsel %vm872, %v557, %v126
  %v877 = vsel %vm872, %v660, %v131
  %v878 = vsel %vm872, %v763, %v136
  %v879 = vsel %vm872, %v866, %v141
  %880 = vst [vmem:[%s3] sm:$0xff] %v873
  %881 = vst [vmem:[%s3 + $0x8] sm:$0xff] %v874
  %882 = vst [vmem:[%s3 + $0x10] sm:$0xff] %v875
  %883 = vst [vmem:[%s3 + $0x18] sm:$0xff] %v876
  %884 = vst [vmem:[%s3 + $0x20] sm:$0xff] %v877
  %885 = vst [vmem:[%s3 + $0x28] sm:$0xff] %v878
  %886 = vst [vmem:[%s3 + $0x30] sm:$0x3] %v879
  // Predicated region
  $region14: #{cosine_activation_forward.1} parent=0 // pred_check
    _
  $region15: #{cosine_activation_forward.1} parent=0 // pred_check_branch
    %888 = sbr.rel (0) target = $region17
  $region16: #{cosine_activation_forward.1} parent=0 // pred_region
    _
  $region17: #{cosine_activation_forward.1} parent=0 // pred_fallthru
    _
  // Predicated region
  $region18: #{cosine_activation_forward.1} parent=0 // pred_check
    _
  $region19: #{cosine_activation_forward.1} parent=0 // pred_check_branch
    %890 = sbr.rel (0) target = $region21
  $region20: #{cosine_activation_forward.1} parent=0 // pred_region
    _
  $region21: #{cosine_activation_forward.1} parent=0 // pred_fallthru
    _

</llo_original>
